<compile_context>
chip_gen: v7x
topology: tpu7x:2x2x1
jax: 0.10.0
libtpu: 0.0.40
codegen_flags: <defaults>
</compile_context>

<pallas_src>
import jax
import jax.numpy as jnp
from jax.experimental import pallas as pl
from jax.experimental.pallas import tpu as pltpu

THETA = 0.7
LEAKY_SLOPE = 0.1


def _oneconv_cdc_kernel(x_ref, w_ref, b_ref, o_ref):
    """One (row_tile, W*Cout) output tile = one bf16 MXU matmul + f32 epilogue.

    x_ref: (1, TH, 3*(W+2)*Cin)   bf16  K-stacked padded input rows (3 vertical taps)
    w_ref: (3*(W+2)*Cin, W*Cout)  bf16  CDC-folded banded weights (resident across steps)
    b_ref: (1, W*Cout)            f32   (1 - theta) * bias, tiled over W
    o_ref: (1, TH, W*Cout)        f32   lane-dense NHWC output tile
    """
    th, k = x_ref.shape[1], x_ref.shape[2]
    n = o_ref.shape[2]
    x = x_ref[...].reshape(th, k)                                        # leading-dim squeeze only
    acc = jnp.dot(x, w_ref[...], preferred_element_type=jnp.float32)     # MXU, f32 accumulate
    y = acc + b_ref[...]                                                 # f32 epilogue
    y = jnp.maximum(y, LEAKY_SLOPE * y)                                  # LeakyReLU(0.1)
    o_ref[...] = y.reshape(1, th, n).astype(o_ref.dtype)


def make_oneconv_cdc(weight, bias, x_shape, *, row_tile=None, theta=THETA):
    """Build a jitted OneConv_cdc forward for fixed (weight, bias, x_shape).

    weight: (Cout, Cin, 3, 3) f32,  bias: (Cout,) f32,  x_shape: (B, Cin, H, W).
    Returns apply(x_nchw) -> (B, Cin + Cout, H, W).
    """
    B, Cin, H, W = x_shape
    Cout = weight.shape[0]
    assert weight.shape == (Cout, Cin, 3, 3)
    K0 = (W + 2) * Cin
    N = W * Cout

    # --- row-tile selection (multiple of 8, divides H; else fall back to full H) ---
    if row_tile is None:
        row_tile = H
        for t in range(min(256, (H // 8) * 8), 0, -8):
            if H % t == 0:
                row_tile = t
                break
    TH = row_tile
    assert H % TH == 0 and (TH % 8 == 0 or TH == H), (H, TH)

    # --- host-side parameter folding: CDC + double bias -> one ordinary 3x3 conv ---
    w32 = weight.astype(jnp.float32)
    kdiff = jnp.sum(w32, axis=(2, 3))                           # (Cout, Cin)
    w_eff = w32.at[:, :, 1, 1].add(-theta * kdiff)              # fold -theta * 1x1 diff conv
    b_eff = ((1.0 - theta) * bias).astype(jnp.float32)          # fold the double bias

    # Banded ("Toeplitz") row weights, 3 vertical taps stacked along K so the kernel is
    # a single matmul:  w_band[dh*K0 + (w+dw)*Cin + ci, w*Cout + co] = w_eff[co, ci, dh, dw]
    wm = jnp.transpose(w_eff, (2, 3, 1, 0))                     # (dh, dw, Cin, Cout)
    bands = [
        sum(jnp.kron(jnp.eye(W + 2, W, k=-dw, dtype=jnp.float32), wm[dh, dw])
            for dw in range(3))
        for dh in range(3)
    ]
    w_band = jnp.concatenate(bands, axis=0).astype(jnp.bfloat16)   # (3*K0, N) bf16
    b_row = jnp.tile(b_eff, W).reshape(1, N)                       # (1, N)    f32

    grid = (B, H // TH)
    conv_call = pl.pallas_call(
        _oneconv_cdc_kernel,
        out_shape=jax.ShapeDtypeStruct((B, H, N), jnp.float32),
        grid=grid,
        in_specs=[
            pl.BlockSpec((1, TH, 3 * K0), lambda b, r: (b, r, 0)),   # pipelined input tiles
            pl.BlockSpec((3 * K0, N), lambda b, r: (0, 0)),          # weights resident
            pl.BlockSpec((1, N), lambda b, r: (0, 0)),               # bias resident
        ],
        out_specs=pl.BlockSpec((1, TH, N), lambda b, r: (b, r, 0)),  # lane-dense stores
        compiler_params=pltpu.CompilerParams(
            dimension_semantics=("parallel", "parallel"),
            vmem_limit_bytes=48 * 1024 * 1024,
        ),
    )

    @jax.jit
    def apply(x_nchw):
        # Lane-dense padded NHWC rows in bf16, then K-stack the 3 vertical taps so each
        # row tile carries its own halo implicitly (no overlapping BlockSpec windows).
        x_nhwc = jnp.transpose(x_nchw.astype(jnp.bfloat16), (0, 2, 3, 1))
        x_pad = jnp.pad(x_nhwc, ((0, 0), (1, 1), (1, 1), (0, 0)))
        rows = x_pad.reshape(B, H + 2, K0)
        x_win = jnp.concatenate(
            [rows[:, 0:H], rows[:, 1:H + 1], rows[:, 2:H + 2]], axis=-1)   # (B, H, 3*K0)

        out = conv_call(x_win, w_band, b_row)                              # (B, H, W*Cout) f32

        # (B, H, W*Cout) row-major == (B, H, W, Cout); back to NCHW and channel-concat.
        out_nchw = jnp.transpose(out.reshape(B, H, W, Cout), (0, 3, 1, 2)).astype(x_nchw.dtype)
        return jnp.concatenate([x_nchw, out_nchw], axis=1)

    return apply


def _reference(x_nchw, weight, bias):
    """Pure-JAX (f32) reference replicating the PyTorch forward (unfolded CDC math)."""
    dn = jax.lax.conv_dimension_numbers(x_nchw.shape, weight.shape,
                                        ("NCHW", "OIHW", "NCHW"))
    out_normal = jax.lax.conv_general_dilated(
        x_nchw, weight, window_strides=(1, 1), padding=((1, 1), (1, 1)),
        dimension_numbers=dn) + bias[None, :, None, None]
    kdiff = weight.sum(axis=(2, 3))[:, :, None, None]
    out_diff = jax.lax.conv_general_dilated(
        x_nchw, kdiff, window_strides=(1, 1), padding=((0, 0), (0, 0)),
        dimension_numbers=dn) + bias[None, :, None, None]
    out = out_normal - THETA * out_diff
    out = jnp.where(out >= 0, out, LEAKY_SLOPE * out)
    return jnp.concatenate([x_nchw, out], axis=1)


if __name__ == "__main__":
    key = jax.random.PRNGKey(0)
    B, G0, G, H, W = 2, 4, 8, 16, 16

    kx, kw, kb = jax.random.split(key, 3)
    x = jax.random.normal(kx, (B, G0, H, W), dtype=jnp.float32)
    # Deterministic synthetic parameters (Conv2d(G0, G, 3, 3, bias=True) shapes/init).
    fan_in = G0 * 3 * 3
    bound = 1.0 / (fan_in ** 0.5)
    weight = jax.random.uniform(kw, (G, G0, 3, 3), minval=-bound, maxval=bound,
                                dtype=jnp.float32)
    bias = jax.random.uniform(kb, (G,), minval=-bound, maxval=bound,
                              dtype=jnp.float32)

    # row_tile=8 deliberately exercises the multi-step row grid at this toy H;
    # the default (auto) picks the largest 8-aligned divisor of H up to 256.
    oneconv = make_oneconv_cdc(weight, bias, x.shape, row_tile=8)

    out = jax.block_until_ready(oneconv(x))
    assert out.shape == (B, G0 + G, H, W), out.shape

    ref = jax.block_until_ready(_reference(x, weight, bias))
    max_err = float(jnp.max(jnp.abs(out - ref)))
    # bf16 operands -> loosened tolerance vs. the f32 reference.
    assert jnp.allclose(out, ref, atol=3e-2, rtol=3e-2), max_err

    print("KERNEL_OK")
</pallas_src>

<mosaic_0001>
module attributes {stable_mosaic.version = 11 : i64} {
  func.func @_oneconv_cdc_kernel(%arg0: i32, %arg1: i32, %arg2: memref<1x8x216xbf16, #tpu.memory_space<vmem>>, %arg3: memref<216x128xbf16, #tpu.memory_space<vmem>>, %arg4: memref<1x128xf32, #tpu.memory_space<vmem>>, %arg5: memref<1x8x128xf32, #tpu.memory_space<vmem>>) attributes {dimension_semantics = [#tpu.dimension_semantics<parallel>, #tpu.dimension_semantics<parallel>], iteration_bounds = array<i64: 2, 2>, scalar_prefetch = 0 : i64, scratch_operands = 0 : i64, tpu.core_type = #tpu.core_type<tc>, window_params = [{transform_indices = @transform_0, window_bounds = array<i64: 1, 8, 216>}, {pipeline_mode = #tpu.pipeline_mode<synchronous>, transform_indices = @transform_1, window_bounds = array<i64: 216, 128>}, {pipeline_mode = #tpu.pipeline_mode<synchronous>, transform_indices = @transform_2, window_bounds = array<i64: 1, 128>}, {transform_indices = @transform_3, window_bounds = array<i64: 1, 8, 128>}]} {
    %c0 = arith.constant 0 : index
    %c0_0 = arith.constant 0 : index
    %c0_1 = arith.constant 0 : index
    %0 = vector.load %arg2[%c0, %c0_0, %c0_1] : memref<1x8x216xbf16, #tpu.memory_space<vmem>>, vector<1x8x216xbf16>
    %1 = vector.shape_cast %0 : vector<1x8x216xbf16> to vector<8x216xbf16>
    %c0_2 = arith.constant 0 : index
    %c0_3 = arith.constant 0 : index
    %2 = vector.load %arg3[%c0_2, %c0_3] : memref<216x128xbf16, #tpu.memory_space<vmem>>, vector<216x128xbf16>
    %cst = arith.constant dense<0.000000e+00> : vector<8x128xf32>
    %3 = tpu.matmul %1, %2, %cst {dimension_numbers = #tpu.dot_dimension_numbers<[1], [0], [0], [1], [0, 0, 1, 1], [], []>} : vector<8x216xbf16>, vector<216x128xbf16>, vector<8x128xf32> -> vector<8x128xf32>
    %c0_4 = arith.constant 0 : index
    %c0_5 = arith.constant 0 : index
    %4 = vector.load %arg4[%c0_4, %c0_5] : memref<1x128xf32, #tpu.memory_space<vmem>>, vector<1x128xf32>
    %5 = vector.broadcast %4 : vector<1x128xf32> to vector<8x128xf32>
    %6 = arith.addf %3, %5 : vector<8x128xf32>
    %cst_6 = arith.constant 1.000000e-01 : f32
    %7 = vector.broadcast %cst_6 : f32 to vector<8x128xf32>
    %8 = arith.mulf %7, %6 : vector<8x128xf32>
    %9 = arith.maximumf %6, %8 : vector<8x128xf32>
    %10 = vector.shape_cast %9 : vector<8x128xf32> to vector<1x8x128xf32>
    %c0_7 = arith.constant 0 : index
    %c0_8 = arith.constant 0 : index
    %c0_9 = arith.constant 0 : index
    %11 = vector.load %arg5[%c0_7, %c0_8, %c0_9] : memref<1x8x128xf32, #tpu.memory_space<vmem>>, vector<1x8x128xf32>
    tpu.vector_store %arg5[%c0_7, %c0_8, %c0_9], %10 {strides = array<i32>} : memref<1x8x128xf32, #tpu.memory_space<vmem>>, vector<1x8x128xf32>,
    return
  }
  func.func @transform_0(%arg0: i32, %arg1: i32) -> (i32, i32, i32) {
    %c0_i32 = arith.constant 0 : i32
    %c0_i32_0 = arith.constant 0 : i32
    return %arg0, %arg1, %c0_i32 : i32, i32, i32
  }
  func.func @transform_1(%arg0: i32, %arg1: i32) -> (i32, i32) {
    %c0_i32 = arith.constant 0 : i32
    %c0_i32_0 = arith.constant 0 : i32
    %c0_i32_1 = arith.constant 0 : i32
    return %c0_i32, %c0_i32_0 : i32, i32
  }
  func.func @transform_2(%arg0: i32, %arg1: i32) -> (i32, i32) {
    %c0_i32 = arith.constant 0 : i32
    %c0_i32_0 = arith.constant 0 : i32
    %c0_i32_1 = arith.constant 0 : i32
    return %c0_i32, %c0_i32_0 : i32, i32
  }
  func.func @transform_3(%arg0: i32, %arg1: i32) -> (i32, i32, i32) {
    %c0_i32 = arith.constant 0 : i32
    %c0_i32_0 = arith.constant 0 : i32
    return %arg0, %arg1, %c0_i32 : i32, i32, i32
  }
}

</mosaic_0001>

<llo_original>
// kernel: apply.1
$region0: #{apply.1}
  #allocation0 [shape = 'u32[]', space=smem, size = 0x4, offset = 0x4, fixed_abs, tag = 'smem constant byte address 0x4 - core index']
  #allocation1 [shape = 'u32[144,128]{1,0:T(1,128)}', space=vmem, size = 0x12000, scoped, tag = 'internal scratch']
  %s0 = inlined_call_operand.vmem [shape: bf16[2,16,216], index: 0, kind: input, shape index: {}]
  %s1 = inlined_call_operand.vmem [shape: bf16[216,128], index: 1, kind: input, shape index: {}]
  %s2 = inlined_call_operand.vmem [shape: f32[1,128], index: 2, kind: input, shape index: {}]
  %s3 = inlined_call_operand.vmem [shape: f32[2,16,128], index: 3, kind: output, shape index: {}]
  %s4 = sld [smem:[#allocation0]]
  $region45: #{apply.1} parent=0
    _
  %s6 = ssub.s32 1, %s4
  %s7 = scalar_select 0, %s6, %s4
  loop: start=0, step=1, limit=6
  $region2: #{apply.1} parent=0 // loop_pre_header
    _
  $region3: #{apply.1} parent=0 // loop_header
    %s9 = sphi 0, %s13
    %p10 = scmp.ge.s32.totalorder %s9, 6
    %s16 = sphi 0, %s28
    %s17 = sphi 0, %s24
    %s18 = sphi 0, %s16
    %s19 = sphi 0, %s17
    %s20 = sphi 0, %s18
    %s21 = sphi 0, %s19
    %s33 = sphi 0, %s35
    %s36 = sphi 0, %s33
    %s37 = sphi 0, %s36
    %s53 = sphi 0, %s37
    %s57 = sphi 0, %s57
    %s59 = sphi 0, %s57
    %s60 = sphi 0, %s59
    %s74 = sphi 0, %s60
    %s78 = sphi 0, %s78
    %s80 = sphi 0, %s78
    %s81 = sphi 0, %s80
    %s95 = sphi 0, %s81
    %s103 = sphi 0, %s105
    %s106 = sphi 0, %s103
    %s107 = sphi 0, %s106
    %s123 = sphi 0, %s107
  $region4: #{apply.1} parent=0 // loop_header_branch
    %12 = sbr.rel (%p10) target = $region8
  $region5: #{apply.1} parent=0 // loop_body
    %s14 = ssub.s32 %s9, 1
    %s15 = ssub.s32 %s9, 2
    %s22 = sadd.s32 1, %s17
    %p23 = scmp.ge.s32.totalorder %s22, 2
    %s24 = scalar_select %p23, 0, %s22
    %s25 = sadd.s32 1, %s16
    %s26 = scalar_select %p23, %s25, %s16
    %p27 = scmp.ge.s32.totalorder %s26, 2
    %s28 = scalar_select %p27, 0, %s26
    %s29 = ssub.s32 %s16, %s28
    %s30 = ssub.s32 %s17, %s24
    %s31 = sor.u32 %s29, %s30
    %p32 = scmp.eq.s32.totalorder %s31, 0
    %s34 = sadd.s32 %s33, 1
    %s35 = scalar_select %p32, %s33, %s34
    %p38 = pneg %p32
    %p39 = scmp.eq.s32.totalorder %s9, 3
    %p40 = por %p38, %p39
    %p41 = scmp.ne.s32.totalorder %s33, %s36
    %p42 = scmp.eq.s32.totalorder %s9, 0
    %p43 = por %p41, %p42
    %p44 = scmp.ne.s32.totalorder %s33, %s36
    %p45 = scmp.eq.s32.totalorder %s14, 3
    %p46 = por %p44, %p45
    %p47 = scmp.ne.s32.totalorder %s36, %s37
    %p48 = scmp.eq.s32.totalorder %s14, 0
    %p49 = por %p47, %p48
    %p50 = scmp.ne.s32.totalorder %s36, %s37
    %p51 = scmp.eq.s32.totalorder %s15, 3
    %p52 = por %p50, %p51
    %p54 = scmp.ne.s32.totalorder %s37, %s53
    %p55 = scmp.eq.s32.totalorder %s15, 0
    %p56 = por %p54, %p55
    %s58 = sadd.s32 %s57, 1
    %p61 = scmp.eq.s32.totalorder %s9, 3
    %p62 = scmp.ne.s32.totalorder %s57, %s59
    %p63 = scmp.eq.s32.totalorder %s9, 0
    %p64 = por %p62, %p63
    %p65 = scmp.ne.s32.totalorder %s57, %s59
    %p66 = scmp.eq.s32.totalorder %s14, 3
    %p67 = por %p65, %p66
    %p68 = scmp.ne.s32.totalorder %s59, %s60
    %p69 = scmp.eq.s32.totalorder %s14, 0
    %p70 = por %p68, %p69
    %p71 = scmp.ne.s32.totalorder %s59, %s60
    %p72 = scmp.eq.s32.totalorder %s15, 3
    %p73 = por %p71, %p72
    %p75 = scmp.ne.s32.totalorder %s60, %s74
    %p76 = scmp.eq.s32.totalorder %s15, 0
    %p77 = por %p75, %p76
    %s79 = sadd.s32 %s78, 1
    %p82 = scmp.eq.s32.totalorder %s9, 3
    %p83 = scmp.ne.s32.totalorder %s78, %s80
    %p84 = scmp.eq.s32.totalorder %s9, 0
    %p85 = por %p83, %p84
    %p86 = scmp.ne.s32.totalorder %s78, %s80
    %p87 = scmp.eq.s32.totalorder %s14, 3
    %p88 = por %p86, %p87
    %p89 = scmp.ne.s32.totalorder %s80, %s81
    %p90 = scmp.eq.s32.totalorder %s14, 0
    %p91 = por %p89, %p90
    %p92 = scmp.ne.s32.totalorder %s80, %s81
    %p93 = scmp.eq.s32.totalorder %s15, 3
    %p94 = por %p92, %p93
    %p96 = scmp.ne.s32.totalorder %s81, %s95
    %p97 = scmp.eq.s32.totalorder %s15, 0
    %p98 = por %p96, %p97
    %s99 = ssub.s32 %s16, %s28
    %s100 = ssub.s32 %s17, %s24
    %s101 = sor.u32 %s99, %s100
    %p102 = scmp.eq.s32.totalorder %s101, 0
    %s104 = sadd.s32 %s103, 1
    %s105 = scalar_select %p102, %s103, %s104
    %p108 = pneg %p102
    %p109 = scmp.eq.s32.totalorder %s9, 3
    %p110 = por %p108, %p109
    %p111 = scmp.ne.s32.totalorder %s103, %s106
    %p112 = scmp.eq.s32.totalorder %s9, 0
    %p113 = por %p111, %p112
    %p114 = scmp.ne.s32.totalorder %s103, %s106
    %p115 = scmp.eq.s32.totalorder %s14, 3
    %p116 = por %p114, %p115
    %p117 = scmp.ne.s32.totalorder %s106, %s107
    %p118 = scmp.eq.s32.totalorder %s14, 0
    %p119 = por %p117, %p118
    %p120 = scmp.ne.s32.totalorder %s106, %s107
    %p121 = scmp.eq.s32.totalorder %s15, 3
    %p122 = por %p120, %p121
    %p124 = scmp.ne.s32.totalorder %s107, %s123
    %p125 = scmp.eq.s32.totalorder %s15, 0
    %p126 = por %p124, %p125
    %p127 = scmp.le.s32.totalorder 1, %s9
    %p128 = scmp.lt.s32.totalorder %s9, 5
    %p129 = pnand %p127, %p128
    %p130 = pneg %p129
    // Predicated region
    $region9: #{apply.1} parent=5 // pred_check
      _
    $region10: #{apply.1} parent=5 // pred_check_branch
      %132 = sbr.rel (%p129) target = $region12
    $region11: #{apply.1} parent=5 // pred_region
      %s133 = ssub.s32 %s9, 1
      // Predicated region
      $region13: #{apply.1} parent=11 // pred_check
        %p134 = pneg %p70
      $region14: #{apply.1} parent=11 // pred_check_branch
        %136 = sbr.rel (%p134) target = $region16
      $region15: #{apply.1} parent=11 // pred_region
        _
      $region16: #{apply.1} parent=11 // pred_fallthru
        _
      // Predicated region
      $region17: #{apply.1} parent=11 // pred_check
        %p137 = pneg %p91
      $region18: #{apply.1} parent=11 // pred_check_branch
        %139 = sbr.rel (%p137) target = $region20
      $region19: #{apply.1} parent=11 // pred_region
        _
      $region20: #{apply.1} parent=11 // pred_fallthru
        _
    $region12: #{apply.1} parent=5 // pred_fallthru
      _
    %p140 = scmp.lt.s32.totalorder %s9, 4
    // Predicated region
    $region21: #{apply.1} parent=5 // pred_check
      %p141 = pneg %p140
    $region22: #{apply.1} parent=5 // pred_check_branch
      %143 = sbr.rel (%p141) target = $region24
    $region23: #{apply.1} parent=5 // pred_region
      // Predicated region
      $region25: #{apply.1} parent=23 // pred_check
        %p144 = pneg %p43
      $region26: #{apply.1} parent=23 // pred_check_branch
        %146 = sbr.rel (%p144) target = $region28
      $region27: #{apply.1} parent=23 // pred_region
        %p147 = scmp.lt.s32.totalorder %s16, 1
        %s148 = scalar_select %p147, %s16, 1
        %p149 = scmp.lt.s32.totalorder %s17, 1
        %s150 = scalar_select %p149, %s17, 1
        %s151 = smul.addr %s150, 2
        %s152 = smul.addr %s148, 4
        %s153 = sadd.s32 %s151, %s152
        %s154 = smul.addr %s153, 4
        %s155 = scalar_lea.vmem %s0, %s154
      $region28: #{apply.1} parent=23 // pred_fallthru
        _
    $region24: #{apply.1} parent=5 // pred_fallthru
      _
    %p156 = scmp.le.s32.totalorder 1, %s9
    %p157 = scmp.lt.s32.totalorder %s9, 5
    %p158 = pnand %p156, %p157
    %p159 = pneg %p158
    // Predicated region
    $region29: #{apply.1} parent=5 // pred_check
      _
    $region30: #{apply.1} parent=5 // pred_check_branch
      %161 = sbr.rel (%p158) target = $region32
    $region31: #{apply.1} parent=5 // pred_region
      %s162 = ssub.s32 %s9, 1
      %p163 = scmp.lt.s32.totalorder %s18, 1
      %s164 = scalar_select %p163, %s18, 1
      %p165 = scmp.lt.s32.totalorder %s19, 1
      %s166 = scalar_select %p165, %s19, 1
      %s167 = smul.addr %s166, 2
      %s168 = smul.addr %s164, 4
      %s169 = sadd.s32 %s167, %s168
      %s170 = smul.addr %s169, 4
      %s171 = scalar_lea.vmem %s0, %s170
      %p172 = pneg %p49
      %p173 = pneg %p46
      %p174 = pneg %p70
      %p175 = pneg %p67
      %p176 = pneg %p91
      %p177 = pneg %p88
      %p178 = pneg %p119
      %p179 = pneg %p116
      %p180 = scmp.lt.s32.totalorder %s18, 1
      %s181 = scalar_select %p180, %s18, 1
      %p182 = scmp.lt.s32.totalorder %s19, 1
      %s183 = scalar_select %p182, %s19, 1
      %s184 = smul.addr %s181, 2
      %s185 = sadd.s32 %s183, %s184
      %s186 = smul.addr %s185, 8
      %s187 = scalar_lea.vmem %s3, %s186
      %p188 = scmp.lt.s32.totalorder %s18, 1
      %s189 = scalar_select %p188, %s18, 1
      %p190 = scmp.lt.s32.totalorder %s19, 1
      %s191 = scalar_select %p190, %s19, 1
      %s192 = smul.addr %s191, 2
      %s193 = smul.addr %s189, 4
      %s194 = sadd.s32 %s192, %s193
      %s195 = smul.addr %s194, 4
      %s196 = scalar_lea.vmem %s0, %s195
      %p197 = scmp.lt.s32.totalorder %s18, 1
      %s198 = scalar_select %p197, %s18, 1
      %p199 = scmp.lt.s32.totalorder %s19, 1
      %s200 = scalar_select %p199, %s19, 1
      %s201 = smul.addr %s198, 2
      %s202 = sadd.s32 %s200, %s201
      %s203 = smul.addr %s202, 8
      %s204 = scalar_lea.vmem %s3, %s203
      %v206 = vld [vmem:[%s196] sm:$0xff]
      %v207 = vld [vmem:[%s1] sm:$0xf]
      %v208 = vld [vmem:[%s1 + $0x4] sm:$0xf]
      %v209 = vld [vmem:[%s1 + $0x8] sm:$0xf]
      %v210 = vld [vmem:[%s1 + $0xc] sm:$0xf]
      %v211 = vld [vmem:[%s1 + $0x10] sm:$0xf]
      %v212 = vld [vmem:[%s1 + $0x14] sm:$0xf]
      %v213 = vld [vmem:[%s1 + $0x18] sm:$0xf]
      %v214 = vld [vmem:[%s1 + $0x1c] sm:$0xf]
      %v215 = vld [vmem:[%s1 + $0x20] sm:$0xf]
      %v216 = vld [vmem:[%s1 + $0x24] sm:$0xf]
      %v217 = vld [vmem:[%s1 + $0x28] sm:$0xf]
      %v218 = vld [vmem:[%s1 + $0x2c] sm:$0xf]
      %v219 = vld [vmem:[%s1 + $0x30] sm:$0xf]
      %v220 = vld [vmem:[%s1 + $0x34] sm:$0xf]
      %v221 = vld [vmem:[%s1 + $0x38] sm:$0xf]
      %v222 = vld [vmem:[%s1 + $0x3c] sm:$0xf]
      %v223 = vld [vmem:[%s1 + $0x40] sm:$0xf]
      %v224 = vld [vmem:[%s1 + $0x44] sm:$0xf]
      %v225 = vld [vmem:[%s1 + $0x48] sm:$0xf]
      %v226 = vld [vmem:[%s1 + $0x4c] sm:$0xf]
      %v227 = vld [vmem:[%s1 + $0x50] sm:$0xf]
      %v228 = vld [vmem:[%s1 + $0x54] sm:$0xf]
      %v229 = vld [vmem:[%s1 + $0x58] sm:$0xf]
      %v230 = vld [vmem:[%s1 + $0x5c] sm:$0xf]
      %v231 = vld [vmem:[%s1 + $0x60] sm:$0xf]
      %v232 = vld [vmem:[%s1 + $0x64] sm:$0xf]
      %v233 = vld [vmem:[%s1 + $0x68] sm:$0xf]
      %v234 = vld [vmem:[%s2] sm:$0x1]
      %v236 = vlaneseq
      %v237 = vshrl.u32 %v236, 7
      %v238 = vsub.s32 0, %v237
      %v239 = vrot.slane %v234, %v238
      %v242 = vunpack.c.l.b16 %v206
      %v243 = vunpack.c.h.b16 %v206
      %v244 = vpack.c.b16 %v242, %v242
      %v245 = vpack.c.b16 %v243, %v243
      %v274 = vunpack.c.l.b16 %v207
      %v275 = vunpack.c.l.b16 %v208
      %v276 = vunpack.c.l.b16 %v209
      %v277 = vunpack.c.l.b16 %v210
      %v278 = vunpack.c.l.b16 %v211
      %v279 = vunpack.c.l.b16 %v212
      %v280 = vunpack.c.l.b16 %v213
      %v281 = vunpack.c.l.b16 %v214
      %v282 = vunpack.c.l.b16 %v215
      %v283 = vunpack.c.l.b16 %v216
      %v284 = vunpack.c.l.b16 %v217
      %v285 = vunpack.c.l.b16 %v218
      %v286 = vunpack.c.l.b16 %v219
      %v287 = vunpack.c.l.b16 %v220
      %v288 = vunpack.c.l.b16 %v221
      %v289 = vunpack.c.l.b16 %v222
      %v290 = vunpack.c.l.b16 %v223
      %v291 = vunpack.c.l.b16 %v224
      %v292 = vunpack.c.l.b16 %v225
      %v293 = vunpack.c.l.b16 %v226
      %v294 = vunpack.c.l.b16 %v227
      %v295 = vunpack.c.l.b16 %v228
      %v296 = vunpack.c.l.b16 %v229
      %v297 = vunpack.c.l.b16 %v230
      %v298 = vunpack.c.l.b16 %v231
      %v299 = vunpack.c.l.b16 %v232
      %v300 = vunpack.c.l.b16 %v233
      %v301 = vpack.c.b16 %v275, %v274
      %v302 = vpack.c.b16 %v277, %v276
      %v303 = vpack.c.b16 %v279, %v278
      %v304 = vpack.c.b16 %v281, %v280
      %v305 = vpack.c.b16 %v283, %v282
      %v306 = vpack.c.b16 %v285, %v284
      %v307 = vpack.c.b16 %v287, %v286
      %v308 = vpack.c.b16 %v289, %v288
      %v309 = vpack.c.b16 %v291, %v290
      %v310 = vpack.c.b16 %v293, %v292
      %v311 = vpack.c.b16 %v295, %v294
      %v312 = vpack.c.b16 %v297, %v296
      %v313 = vpack.c.b16 %v299, %v298
      %v314 = vpack.c.b16 %v300, %v300
      %vm328 = vcmask 719872
      %v330 = vsel %vm328, %v245, 0
      %vm332 = vcmask 1043456
      %v334 = vsel %vm332, %v314, 0
      %336 = vmatprep.subr.bf16.mxu0 0
      %337 = vmatpush1.bf16.msra.mxu0 %v301
      %338 = vmatprep.subr.bf16.mxu0 0
      %339 = vmatpush1.bf16.msra.mxu0 %v302
      %340 = vmatprep.subr.bf16.mxu0 0
      %341 = vmatpush1.bf16.msra.mxu0 %v303
      %342 = vmatprep.subr.bf16.mxu0 0
      %343 = vmatpush1.bf16.msra.mxu0 %v304
      %344 = vmatprep.subr.bf16.mxu0 0
      %345 = vmatpush1.bf16.msra.mxu0 %v305
      %346 = vmatprep.subr.bf16.mxu0 0
      %347 = vmatpush1.bf16.msra.mxu0 %v306
      %348 = vmatprep.subr.bf16.mxu0 0
      %349 = vmatpush1.bf16.msra.mxu0 %v307
      %350 = vmatprep.subr.bf16.mxu0 0
      %351 = vmatpush1.bf16.msra.mxu0 %v308
      %352 = vmatprep.subr.bf16.mxu0 0
      %353 = vmatpush1.bf16.msra.mxu0 %v309
      %354 = vmatprep.subr.bf16.mxu0 0
      %355 = vmatpush1.bf16.msra.mxu0 %v310
      %356 = vmatprep.subr.bf16.mxu0 0
      %357 = vmatpush1.bf16.msra.mxu0 %v311
      %358 = vmatprep.subr.bf16.mxu0 0
      %359 = vmatpush1.bf16.msra.mxu0 %v312
      %360 = vmatprep.subr.bf16.mxu0 0
      %361 = vmatpush1.bf16.msra.mxu0 %v313
      %362 = vmatprep.subr.bf16.mxu0 0
      %363 = vmatpush1.bf16.msra.mxu0 %v334
      %364 = vmatprep.subr.bf16.mxu0 0
      %365 = vmatpush1.bf16.msra.mxu0 0
      %366 = vmatprep.subr.bf16.mxu0 0
      %367 = vmatpush1.bf16.msra.mxu0 0
      %368 = vmatprep.mubr.bf16.mxu0 %v330
      %369 = vmatmul.mubr.bf16.gmra.mrb[0].mxu0 %v244
      %v370 = vpop.f32.mrb[0].mxu0
      %v371 = vadd.f32 %v239, %v370
      %v372 = vpop.f32.mrb[0].mxu0
      %v373 = vpop.f32.mrb[0].mxu0
      %v374 = vpop.f32.mrb[0].mxu0
      %375 = vdwg.mxu0
      %v376 = vmul.f32 %v371, 0.1
      %v377 = vmax.f32 %v371, %v376
      %378 = vst [vmem:[%s204] sm:$0xff] %v377
      %p379 = scmp.lt.s32.totalorder %s18, 1
      %s380 = scalar_select %p379, %s18, 1
      %p381 = scmp.lt.s32.totalorder %s19, 1
      %s382 = scalar_select %p381, %s19, 1
      %s383 = smul.addr %s380, 2
      %s384 = sadd.s32 %s382, %s383
      %s385 = smul.addr %s384, 8
      %s386 = scalar_lea.vmem %s3, %s385
      // Predicated region
      $region33: #{apply.1} parent=31 // pred_check
        %p387 = pneg %p116
      $region34: #{apply.1} parent=31 // pred_check_branch
        %389 = sbr.rel (%p387) target = $region36
      $region35: #{apply.1} parent=31 // pred_region
        _
      $region36: #{apply.1} parent=31 // pred_fallthru
        _
    $region32: #{apply.1} parent=5 // pred_fallthru
      _
    %p390 = scmp.le.s32.totalorder 2, %s9
    // Predicated region
    $region37: #{apply.1} parent=5 // pred_check
      %p391 = pneg %p390
    $region38: #{apply.1} parent=5 // pred_check_branch
      %393 = sbr.rel (%p391) target = $region40
    $region39: #{apply.1} parent=5 // pred_region
      %s394 = ssub.s32 %s9, 2
      // Predicated region
      $region41: #{apply.1} parent=39 // pred_check
        %p395 = pneg %p122
      $region42: #{apply.1} parent=39 // pred_check_branch
        %397 = sbr.rel (%p395) target = $region44
      $region43: #{apply.1} parent=39 // pred_region
        %p398 = scmp.lt.s32.totalorder %s20, 1
        %s399 = scalar_select %p398, %s20, 1
        %p400 = scmp.lt.s32.totalorder %s21, 1
        %s401 = scalar_select %p400, %s21, 1
        %s402 = smul.addr %s399, 2
        %s403 = sadd.s32 %s401, %s402
        %s404 = smul.addr %s403, 8
        %s405 = scalar_lea.vmem %s3, %s404
      $region44: #{apply.1} parent=39 // pred_fallthru
        _
    $region40: #{apply.1} parent=5 // pred_fallthru
      _
  $region6: #{apply.1} parent=0 // loop_footer
    %s13 = sadd.s32 1, %s9
  $region7: #{apply.1} parent=0 // loop_footer_branch
    %8 = sbr.rel target = $region3
  $region8: #{apply.1} parent=0 // loop_exit
    _

</llo_original>
